<compile_context>
chip_gen: v7x
topology: tpu7x:2x2x1
jax: 0.10.0
libtpu: 0.0.40
codegen_flags: <defaults>
</compile_context>

<pallas_src>
import jax
import jax.numpy as jnp
from jax.experimental import pallas as pl
from jax.experimental.pallas import tpu as pltpu

LANE = 128
TARGET_TILE_BYTES = 4 * 1024 * 1024   # per-operand tile; x2 operands x2 buffers = 16 MiB
VMEM_LIMIT_BYTES = 32 * 1024 * 1024   # explicit so v5e's 16 MiB scoped default can't OOM
SMALL_N = 64 * 1024                   # below this, fused XLA elementwise is faster

MIN_V = 1e-5
MAX_V = 1e6


def _round_up(a: int, b: int) -> int:
    return ((a + b - 1) // b) * b


def _sublane_multiple(dtype) -> int:
    """Row quantum for a lane-dense (rows, 128) slab of this dtype."""
    itemsize = jnp.dtype(dtype).itemsize
    return max(8, 32 // itemsize)  # 8 (32-bit), 16 (16-bit), 32 (8-bit)


def _mean_act_formula(x):
    # Exactly the torch module: clamp(exp(x) - 1.0, 1e-5, 1e6).
    return jnp.clip(jnp.exp(x) - 1.0, MIN_V, MAX_V)


def _mean_act_kernel(x_ref, o_ref):
    # f32 math (no-op cast for f32 inputs); exp runs on the EUP slot and is
    # hidden under the DMA on this memory-bound op.
    x = x_ref[...].astype(jnp.float32)
    o_ref[...] = jnp.clip(jnp.exp(x) - 1.0, MIN_V, MAX_V).astype(o_ref.dtype)


def _mean_act_slab(x2: jax.Array) -> jax.Array:
    """Run the Pallas kernel over a lane-dense (rows, 128) slab."""
    rows, lane = x2.shape
    dtype = x2.dtype
    itemsize = jnp.dtype(dtype).itemsize
    sub = _sublane_multiple(dtype)

    # ~4 MiB tiles amortize per-step overhead; always >= 2 grid steps so the
    # "parallel" axis can be sharded across v7x's two TensorCores.
    max_tile_rows = max(sub, TARGET_TILE_BYTES // (LANE * itemsize))
    tile_rows = min(max_tile_rows, _round_up(pl.cdiv(rows, 2), sub))
    grid = (pl.cdiv(rows, tile_rows),)

    return pl.pallas_call(
        _mean_act_kernel,
        out_shape=jax.ShapeDtypeStruct((rows, lane), dtype),
        grid=grid,
        in_specs=[pl.BlockSpec((tile_rows, LANE), lambda i: (i, 0))],
        out_specs=pl.BlockSpec((tile_rows, LANE), lambda i: (i, 0)),
        compiler_params=pltpu.CompilerParams(
            dimension_semantics=("parallel",),
            vmem_limit_bytes=VMEM_LIMIT_BYTES,
        ),
    )(x2)


def mean_act(x: jax.Array) -> jax.Array:
    """Applies clamp(exp(x) - 1, 1e-5, 1e6) elementwise (Pallas TPU kernel)."""
    if not jnp.issubdtype(x.dtype, jnp.floating):
        raise TypeError(f"mean_act requires a floating dtype, got {x.dtype}")

    orig_shape = x.shape
    n = x.size

    # Tiny tensors: pallas_call launch/pipeline setup dominates -> plain XLA.
    if n < SMALL_N:
        return _mean_act_formula(x)

    xf = x.reshape(-1)
    if n % LANE == 0:
        # Common path: free reshape to a lane-dense slab, no extra HBM passes.
        return _mean_act_slab(xf.reshape(n // LANE, LANE)).reshape(orig_shape)

    # Ragged path: kernel on the 128-aligned bulk, tiny (<128 elem) tail in jnp.
    # Avoids the jnp.pad + out[:n] full read+write HBM round trips.
    n_bulk = (n // LANE) * LANE
    bulk = _mean_act_slab(xf[:n_bulk].reshape(n_bulk // LANE, LANE)).reshape(-1)
    tail = _mean_act_formula(xf[n_bulk:])
    return jnp.concatenate([bulk, tail]).reshape(orig_shape)


if __name__ == "__main__":
    key = jax.random.PRNGKey(0)
    k1, k2, k3 = jax.random.split(key, 3)

    # 1) Typical tiny decoder activation (NCHW-like) -> small-input fast path.
    x_small = jax.random.normal(k1, (2, 4, 16, 16), dtype=jnp.float32)
    y_small = mean_act(x_small)
    jax.block_until_ready(y_small)
    ref_small = jnp.clip(jnp.exp(x_small) - 1.0, MIN_V, MAX_V)
    assert y_small.shape == x_small.shape and y_small.dtype == x_small.dtype
    assert jnp.allclose(y_small, ref_small, rtol=1e-6, atol=1e-6)

    # 2) Lane-aligned tensor large enough to exercise the Pallas slab path
    #    (131072 elems -> rows=1024, 2 parallel grid steps).
    x_big = jax.random.normal(k2, (64, 2048), dtype=jnp.float32)
    y_big = mean_act(x_big)
    jax.block_until_ready(y_big)
    ref_big = jnp.clip(jnp.exp(x_big) - 1.0, MIN_V, MAX_V)
    assert y_big.shape == x_big.shape and y_big.dtype == x_big.dtype
    assert jnp.allclose(y_big, ref_big, rtol=1e-6, atol=1e-6)

    # 3) Ragged element count (99459 elems) -> bulk kernel + jnp tail path.
    x_rag = jax.random.normal(k3, (3, 257, 129), dtype=jnp.float32)
    y_rag = mean_act(x_rag)
    jax.block_until_ready(y_rag)
    ref_rag = jnp.clip(jnp.exp(x_rag) - 1.0, MIN_V, MAX_V)
    assert y_rag.shape == x_rag.shape and y_rag.dtype == x_rag.dtype
    assert jnp.allclose(y_rag, ref_rag, rtol=1e-6, atol=1e-6)

    print("KERNEL_OK")
</pallas_src>

<mosaic_0001>
module attributes {stable_mosaic.version = 11 : i64} {
  func.func @_mean_act_kernel(%arg0: i32, %arg1: memref<512x128xf32, #tpu.memory_space<vmem>>, %arg2: memref<512x128xf32, #tpu.memory_space<vmem>>) attributes {dimension_semantics = [#tpu.dimension_semantics<parallel>], iteration_bounds = array<i64: 2>, scalar_prefetch = 0 : i64, scratch_operands = 0 : i64, tpu.core_type = #tpu.core_type<tc>, window_params = [{transform_indices = @transform_0, window_bounds = array<i64: 512, 128>}, {transform_indices = @transform_1, window_bounds = array<i64: 512, 128>}]} {
    %c0 = arith.constant 0 : index
    %c0_0 = arith.constant 0 : index
    %0 = vector.load %arg1[%c0, %c0_0] : memref<512x128xf32, #tpu.memory_space<vmem>>, vector<512x128xf32>
    %1 = math.exp %0 : vector<512x128xf32>
    %cst = arith.constant 1.000000e+00 : f32
    %2 = vector.broadcast %cst : f32 to vector<512x128xf32>
    %3 = arith.subf %1, %2 : vector<512x128xf32>
    %cst_1 = arith.constant 9.99999974E-6 : f32
    %cst_2 = arith.constant 1.000000e+06 : f32
    %4 = vector.broadcast %cst_1 : f32 to vector<512x128xf32>
    %5 = arith.maximumf %4, %3 : vector<512x128xf32>
    %6 = vector.broadcast %cst_2 : f32 to vector<512x128xf32>
    %7 = arith.minimumf %6, %5 : vector<512x128xf32>
    %c0_3 = arith.constant 0 : index
    %c0_4 = arith.constant 0 : index
    %8 = vector.load %arg2[%c0_3, %c0_4] : memref<512x128xf32, #tpu.memory_space<vmem>>, vector<512x128xf32>
    tpu.vector_store %arg2[%c0_3, %c0_4], %7 {strides = array<i32>} : memref<512x128xf32, #tpu.memory_space<vmem>>, vector<512x128xf32>,
    return
  }
  func.func @transform_0(%arg0: i32) -> (i32, i32) {
    %c0_i32 = arith.constant 0 : i32
    %c0_i32_0 = arith.constant 0 : i32
    return %arg0, %c0_i32 : i32, i32
  }
  func.func @transform_1(%arg0: i32) -> (i32, i32) {
    %c0_i32 = arith.constant 0 : i32
    %c0_i32_0 = arith.constant 0 : i32
    return %arg0, %c0_i32 : i32, i32
  }
}

</mosaic_0001>

<llo_original>
// kernel: tpu_custom_call.1
$region0: #{tpu_custom_call.1}
  #allocation0 [shape = 'u32[]', space=smem, size = 0x4, offset = 0x4, fixed_abs, tag = 'smem constant byte address 0x4 - core index']
  #allocation1 [shape = 'u32[144,128]{1,0:T(1,128)}', space=vmem, size = 0x12000, scoped, tag = 'internal scratch']
  %s0 = inlined_call_operand.hbm [shape: f32[1024,128], index: 0, kind: input, shape index: {}]
  %s1 = inlined_call_operand.hbm [shape: f32[1024,128], index: 1, kind: output, shape index: {}]
  %s2 = sld [smem:[#allocation0]]
  $region41: #{tpu_custom_call.1} parent=0
    _
  %s4 = ssub.s32 1, %s2
  %s5 = scalar_select 0, %s4, %s2
  $region1: #{tpu_custom_call.1} parent=0
    #allocation2 [shape = 'u8[524288]{0}', space=vmem, size = 0x80000, scoped, tag = 'input window, operand 0']
    #allocation3 [shape = 's32[2]{0}', space=sflag, size = 0x8, scoped, tag = 'scoped memory for tpu_custom_call.1']
    #allocation4 [shape = 's32[2]{0}', space=sflag, size = 0x8, scoped, tag = 'scoped memory for tpu_custom_call.1']
    #allocation5 [shape = 'u8[524288]{0}', space=vmem, size = 0x80000, scoped, tag = 'output window, operand 0']
    %6 = vsyncpa [#allocation3], 0
    %s7 = scalar_lea.sflag [#allocation3], 1
    %8 = vsyncpa %s7, 0
    %9 = vsyncpa [#allocation4], 0
    %s10 = scalar_lea.sflag [#allocation4], 1
    %11 = vsyncpa %s10, 0
    loop: start=0, step=1, limit=4
    $region2: #{tpu_custom_call.1} parent=1 // loop_pre_header
      _
    $region3: #{tpu_custom_call.1} parent=1 // loop_header
      %s13 = sphi 0, %s17
      %p14 = scmp.ge.s32.totalorder %s13, 4
      %s23 = sphi 0, %s25
      %s26 = sphi 0, %s23
      %s27 = sphi 0, %s26
      %s43 = sphi 0, %s27
      %s49 = sphi 0, %s51
      %s52 = sphi 0, %s49
      %s53 = sphi 0, %s52
      %s69 = sphi 0, %s53
    $region4: #{tpu_custom_call.1} parent=1 // loop_header_branch
      %16 = sbr.rel (%p14) target = $region8
    $region5: #{tpu_custom_call.1} parent=1 // loop_body
      %s18 = ssub.s32 %s13, 1
      %s19 = ssub.s32 %s13, 2
      %s20 = sadd.s32 %s13, 1
      %s21 = ssub.s32 %s13, %s20
      %p22 = scmp.eq.s32.totalorder %s21, 0
      %s24 = sadd.s32 %s23, 1
      %s25 = scalar_select %p22, %s23, %s24
      %p28 = pneg %p22
      %p29 = scmp.eq.s32.totalorder %s13, 1
      %p30 = por %p28, %p29
      %p31 = scmp.ne.s32.totalorder %s23, %s26
      %p32 = scmp.eq.s32.totalorder %s13, 0
      %p33 = por %p31, %p32
      %p34 = scmp.ne.s32.totalorder %s23, %s26
      %p35 = scmp.eq.s32.totalorder %s18, 1
      %p36 = por %p34, %p35
      %p37 = scmp.ne.s32.totalorder %s26, %s27
      %p38 = scmp.eq.s32.totalorder %s18, 0
      %p39 = por %p37, %p38
      %p40 = scmp.ne.s32.totalorder %s26, %s27
      %p41 = scmp.eq.s32.totalorder %s19, 1
      %p42 = por %p40, %p41
      %p44 = scmp.ne.s32.totalorder %s27, %s43
      %p45 = scmp.eq.s32.totalorder %s19, 0
      %p46 = por %p44, %p45
      %s47 = ssub.s32 %s13, %s20
      %p48 = scmp.eq.s32.totalorder %s47, 0
      %s50 = sadd.s32 %s49, 1
      %s51 = scalar_select %p48, %s49, %s50
      %p54 = pneg %p48
      %p55 = scmp.eq.s32.totalorder %s13, 1
      %p56 = por %p54, %p55
      %p57 = scmp.ne.s32.totalorder %s49, %s52
      %p58 = scmp.eq.s32.totalorder %s13, 0
      %p59 = por %p57, %p58
      %p60 = scmp.ne.s32.totalorder %s49, %s52
      %p61 = scmp.eq.s32.totalorder %s18, 1
      %p62 = por %p60, %p61
      %p63 = scmp.ne.s32.totalorder %s52, %s53
      %p64 = scmp.eq.s32.totalorder %s18, 0
      %p65 = por %p63, %p64
      %p66 = scmp.ne.s32.totalorder %s52, %s53
      %p67 = scmp.eq.s32.totalorder %s19, 1
      %p68 = por %p66, %p67
      %p70 = scmp.ne.s32.totalorder %s53, %s69
      %p71 = scmp.eq.s32.totalorder %s19, 0
      %p72 = por %p70, %p71
      %p73 = scmp.le.s32.totalorder 1, %s13
      %p74 = scmp.lt.s32.totalorder %s13, 3
      %p75 = pnand %p73, %p74
      %p76 = pneg %p75
      // Predicated region
      $region9: #{tpu_custom_call.1} parent=5 // pred_check
        _
      $region10: #{tpu_custom_call.1} parent=5 // pred_check_branch
        %78 = sbr.rel (%p75) target = $region12
      $region11: #{tpu_custom_call.1} parent=5 // pred_region
        %s79 = ssub.s32 %s13, 1
      $region12: #{tpu_custom_call.1} parent=5 // pred_fallthru
        _
      %p80 = scmp.lt.s32.totalorder %s13, 2
      // Predicated region
      $region13: #{tpu_custom_call.1} parent=5 // pred_check
        %p81 = pneg %p80
      $region14: #{tpu_custom_call.1} parent=5 // pred_check_branch
        %83 = sbr.rel (%p81) target = $region16
      $region15: #{tpu_custom_call.1} parent=5 // pred_region
        // Predicated region
        $region17: #{tpu_custom_call.1} parent=15 // pred_check
          %p84 = pneg %p33
        $region18: #{tpu_custom_call.1} parent=15 // pred_check_branch
          %86 = sbr.rel (%p84) target = $region20
        $region19: #{tpu_custom_call.1} parent=15 // pred_region
          %s87 = sand.u32 %s23, 1
          %s88 = scalar_lea.sflag [#allocation3], %s87
          %s89 = sand.u32 %s23, 1
          %s90 = smul.addr %s89, 512
          %s91 = scalar_lea.vmem [#allocation2], %s90
          %s92 = smul.u32 64, %s13
          %s94 = ssub.s32 8192, 8192
          %95 = vsyncadd %s88, %s94
          %s96 = smul.addr %s92, 128
          %s97 = scalar_lea.hbm %s0, %s96
          %s98 = sshll.u32 %s91, 4
          %s99 = int_to_ptr.vmem [resolvable:$true] %s98
          %104 = dma.hbm_to_vmem [thread:$0]  %s97, 8192, %s99, %s88, 128, 128, 8
        $region20: #{tpu_custom_call.1} parent=15 // pred_fallthru
          _
      $region16: #{tpu_custom_call.1} parent=5 // pred_fallthru
        _
      %p105 = scmp.le.s32.totalorder 1, %s13
      %p106 = scmp.lt.s32.totalorder %s13, 3
      %p107 = pnand %p105, %p106
      %p108 = pneg %p107
      // Predicated region
      $region21: #{tpu_custom_call.1} parent=5 // pred_check
        _
      $region22: #{tpu_custom_call.1} parent=5 // pred_check_branch
        %110 = sbr.rel (%p107) target = $region24
      $region23: #{tpu_custom_call.1} parent=5 // pred_region
        %s111 = ssub.s32 %s13, 1
        %s112 = sand.u32 %s26, 1
        %s113 = scalar_lea.sflag [#allocation3], %s112
        %s114 = sand.u32 %s26, 1
        %s115 = smul.addr %s114, 512
        %s116 = scalar_lea.vmem [#allocation2], %s115
        // Predicated region
        $region25: #{tpu_custom_call.1} parent=23 // pred_check
          %p117 = pneg %p39
        $region26: #{tpu_custom_call.1} parent=23 // pred_check_branch
          %119 = sbr.rel (%p117) target = $region28
        $region27: #{tpu_custom_call.1} parent=23 // pred_region
          %120 = dma.done %s113, 8192
        $region28: #{tpu_custom_call.1} parent=23 // pred_fallthru
          _
        %s121 = sand.u32 %s26, 1
        %s122 = scalar_lea.sflag [#allocation3], %s121
        %s123 = sand.u32 %s26, 1
        %s124 = smul.addr %s123, 512
        %s125 = scalar_lea.vmem [#allocation2], %s124
        %p126 = pneg %p39
        %p127 = pneg %p36
        %p128 = pneg %p65
        %p129 = pneg %p62
        %s130 = sand.u32 %s52, 1
        %s131 = scalar_lea.sflag [#allocation4], %s130
        %s132 = sand.u32 %s52, 1
        %s133 = smul.addr %s132, 512
        %s134 = scalar_lea.vmem [#allocation5], %s133
        %s135 = smul.u32 64, %s18
        %s136 = smul.u32 64, %s18
        %v137 = vld [vmem:[%s116] sm:$0xff]
        %v138 = vld [vmem:[%s116 + $0x8] sm:$0xff]
        %v139 = vld [vmem:[%s116 + $0x10] sm:$0xff]
        %v140 = vld [vmem:[%s116 + $0x18] sm:$0xff]
        %v141 = vld [vmem:[%s116 + $0x20] sm:$0xff]
        %v142 = vld [vmem:[%s116 + $0x28] sm:$0xff]
        %v143 = vld [vmem:[%s116 + $0x30] sm:$0xff]
        %v144 = vld [vmem:[%s116 + $0x38] sm:$0xff]
        %v145 = vld [vmem:[%s116 + $0x40] sm:$0xff]
        %v146 = vld [vmem:[%s116 + $0x48] sm:$0xff]
        %v147 = vld [vmem:[%s116 + $0x50] sm:$0xff]
        %v148 = vld [vmem:[%s116 + $0x58] sm:$0xff]
        %v149 = vld [vmem:[%s116 + $0x60] sm:$0xff]
        %v150 = vld [vmem:[%s116 + $0x68] sm:$0xff]
        %v151 = vld [vmem:[%s116 + $0x70] sm:$0xff]
        %v152 = vld [vmem:[%s116 + $0x78] sm:$0xff]
        %v153 = vld [vmem:[%s116 + $0x80] sm:$0xff]
        %v154 = vld [vmem:[%s116 + $0x88] sm:$0xff]
        %v155 = vld [vmem:[%s116 + $0x90] sm:$0xff]
        %v156 = vld [vmem:[%s116 + $0x98] sm:$0xff]
        %v157 = vld [vmem:[%s116 + $0xa0] sm:$0xff]
        %v158 = vld [vmem:[%s116 + $0xa8] sm:$0xff]
        %v159 = vld [vmem:[%s116 + $0xb0] sm:$0xff]
        %v160 = vld [vmem:[%s116 + $0xb8] sm:$0xff]
        %v161 = vld [vmem:[%s116 + $0xc0] sm:$0xff]
        %v162 = vld [vmem:[%s116 + $0xc8] sm:$0xff]
        %v163 = vld [vmem:[%s116 + $0xd0] sm:$0xff]
        %v164 = vld [vmem:[%s116 + $0xd8] sm:$0xff]
        %v165 = vld [vmem:[%s116 + $0xe0] sm:$0xff]
        %v166 = vld [vmem:[%s116 + $0xe8] sm:$0xff]
        %v167 = vld [vmem:[%s116 + $0xf0] sm:$0xff]
        %v168 = vld [vmem:[%s116 + $0xf8] sm:$0xff]
        %v169 = vld [vmem:[%s116 + $0x100] sm:$0xff]
        %v170 = vld [vmem:[%s116 + $0x108] sm:$0xff]
        %v171 = vld [vmem:[%s116 + $0x110] sm:$0xff]
        %v172 = vld [vmem:[%s116 + $0x118] sm:$0xff]
        %v173 = vld [vmem:[%s116 + $0x120] sm:$0xff]
        %v174 = vld [vmem:[%s116 + $0x128] sm:$0xff]
        %v175 = vld [vmem:[%s116 + $0x130] sm:$0xff]
        %v176 = vld [vmem:[%s116 + $0x138] sm:$0xff]
        %v177 = vld [vmem:[%s116 + $0x140] sm:$0xff]
        %v178 = vld [vmem:[%s116 + $0x148] sm:$0xff]
        %v179 = vld [vmem:[%s116 + $0x150] sm:$0xff]
        %v180 = vld [vmem:[%s116 + $0x158] sm:$0xff]
        %v181 = vld [vmem:[%s116 + $0x160] sm:$0xff]
        %v182 = vld [vmem:[%s116 + $0x168] sm:$0xff]
        %v183 = vld [vmem:[%s116 + $0x170] sm:$0xff]
        %v184 = vld [vmem:[%s116 + $0x178] sm:$0xff]
        %v185 = vld [vmem:[%s116 + $0x180] sm:$0xff]
        %v186 = vld [vmem:[%s116 + $0x188] sm:$0xff]
        %v187 = vld [vmem:[%s116 + $0x190] sm:$0xff]
        %v188 = vld [vmem:[%s116 + $0x198] sm:$0xff]
        %v189 = vld [vmem:[%s116 + $0x1a0] sm:$0xff]
        %v190 = vld [vmem:[%s116 + $0x1a8] sm:$0xff]
        %v191 = vld [vmem:[%s116 + $0x1b0] sm:$0xff]
        %v192 = vld [vmem:[%s116 + $0x1b8] sm:$0xff]
        %v193 = vld [vmem:[%s116 + $0x1c0] sm:$0xff]
        %v194 = vld [vmem:[%s116 + $0x1c8] sm:$0xff]
        %v195 = vld [vmem:[%s116 + $0x1d0] sm:$0xff]
        %v196 = vld [vmem:[%s116 + $0x1d8] sm:$0xff]
        %v197 = vld [vmem:[%s116 + $0x1e0] sm:$0xff]
        %v198 = vld [vmem:[%s116 + $0x1e8] sm:$0xff]
        %v199 = vld [vmem:[%s116 + $0x1f0] sm:$0xff]
        %v200 = vld [vmem:[%s116 + $0x1f8] sm:$0xff]
        %v201 = vmul.f32 %v137, 1.442695
        %v202 = vpow.pop %v201
        %v203 = vmul.f32 %v138, 1.442695
        %v204 = vpow.pop %v203
        %v205 = vmul.f32 %v139, 1.442695
        %v206 = vpow.pop %v205
        %v207 = vmul.f32 %v140, 1.442695
        %v208 = vpow.pop %v207
        %v209 = vmul.f32 %v141, 1.442695
        %v210 = vpow.pop %v209
        %v211 = vmul.f32 %v142, 1.442695
        %v212 = vpow.pop %v211
        %v213 = vmul.f32 %v143, 1.442695
        %v214 = vpow.pop %v213
        %v215 = vmul.f32 %v144, 1.442695
        %v216 = vpow.pop %v215
        %v217 = vmul.f32 %v145, 1.442695
        %v218 = vpow.pop %v217
        %v219 = vmul.f32 %v146, 1.442695
        %v220 = vpow.pop %v219
        %v221 = vmul.f32 %v147, 1.442695
        %v222 = vpow.pop %v221
        %v223 = vmul.f32 %v148, 1.442695
        %v224 = vpow.pop %v223
        %v225 = vmul.f32 %v149, 1.442695
        %v226 = vpow.pop %v225
        %v227 = vmul.f32 %v150, 1.442695
        %v228 = vpow.pop %v227
        %v229 = vmul.f32 %v151, 1.442695
        %v230 = vpow.pop %v229
        %v231 = vmul.f32 %v152, 1.442695
        %v232 = vpow.pop %v231
        %v233 = vmul.f32 %v153, 1.442695
        %v234 = vpow.pop %v233
        %v235 = vmul.f32 %v154, 1.442695
        %v236 = vpow.pop %v235
        %v237 = vmul.f32 %v155, 1.442695
        %v238 = vpow.pop %v237
        %v239 = vmul.f32 %v156, 1.442695
        %v240 = vpow.pop %v239
        %v241 = vmul.f32 %v157, 1.442695
        %v242 = vpow.pop %v241
        %v243 = vmul.f32 %v158, 1.442695
        %v244 = vpow.pop %v243
        %v245 = vmul.f32 %v159, 1.442695
        %v246 = vpow.pop %v245
        %v247 = vmul.f32 %v160, 1.442695
        %v248 = vpow.pop %v247
        %v249 = vmul.f32 %v161, 1.442695
        %v250 = vpow.pop %v249
        %v251 = vmul.f32 %v162, 1.442695
        %v252 = vpow.pop %v251
        %v253 = vmul.f32 %v163, 1.442695
        %v254 = vpow.pop %v253
        %v255 = vmul.f32 %v164, 1.442695
        %v256 = vpow.pop %v255
        %v257 = vmul.f32 %v165, 1.442695
        %v258 = vpow.pop %v257
        %v259 = vmul.f32 %v166, 1.442695
        %v260 = vpow.pop %v259
        %v261 = vmul.f32 %v167, 1.442695
        %v262 = vpow.pop %v261
        %v263 = vmul.f32 %v168, 1.442695
        %v264 = vpow.pop %v263
        %v265 = vmul.f32 %v169, 1.442695
        %v266 = vpow.pop %v265
        %v267 = vmul.f32 %v170, 1.442695
        %v268 = vpow.pop %v267
        %v269 = vmul.f32 %v171, 1.442695
        %v270 = vpow.pop %v269
        %v271 = vmul.f32 %v172, 1.442695
        %v272 = vpow.pop %v271
        %v273 = vmul.f32 %v173, 1.442695
        %v274 = vpow.pop %v273
        %v275 = vmul.f32 %v174, 1.442695
        %v276 = vpow.pop %v275
        %v277 = vmul.f32 %v175, 1.442695
        %v278 = vpow.pop %v277
        %v279 = vmul.f32 %v176, 1.442695
        %v280 = vpow.pop %v279
        %v281 = vmul.f32 %v177, 1.442695
        %v282 = vpow.pop %v281
        %v283 = vmul.f32 %v178, 1.442695
        %v284 = vpow.pop %v283
        %v285 = vmul.f32 %v179, 1.442695
        %v286 = vpow.pop %v285
        %v287 = vmul.f32 %v180, 1.442695
        %v288 = vpow.pop %v287
        %v289 = vmul.f32 %v181, 1.442695
        %v290 = vpow.pop %v289
        %v291 = vmul.f32 %v182, 1.442695
        %v292 = vpow.pop %v291
        %v293 = vmul.f32 %v183, 1.442695
        %v294 = vpow.pop %v293
        %v295 = vmul.f32 %v184, 1.442695
        %v296 = vpow.pop %v295
        %v297 = vmul.f32 %v185, 1.442695
        %v298 = vpow.pop %v297
        %v299 = vmul.f32 %v186, 1.442695
        %v300 = vpow.pop %v299
        %v301 = vmul.f32 %v187, 1.442695
        %v302 = vpow.pop %v301
        %v303 = vmul.f32 %v188, 1.442695
        %v304 = vpow.pop %v303
        %v305 = vmul.f32 %v189, 1.442695
        %v306 = vpow.pop %v305
        %v307 = vmul.f32 %v190, 1.442695
        %v308 = vpow.pop %v307
        %v309 = vmul.f32 %v191, 1.442695
        %v310 = vpow.pop %v309
        %v311 = vmul.f32 %v192, 1.442695
        %v312 = vpow.pop %v311
        %v313 = vmul.f32 %v193, 1.442695
        %v314 = vpow.pop %v313
        %v315 = vmul.f32 %v194, 1.442695
        %v316 = vpow.pop %v315
        %v317 = vmul.f32 %v195, 1.442695
        %v318 = vpow.pop %v317
        %v319 = vmul.f32 %v196, 1.442695
        %v320 = vpow.pop %v319
        %v321 = vmul.f32 %v197, 1.442695
        %v322 = vpow.pop %v321
        %v323 = vmul.f32 %v198, 1.442695
        %v324 = vpow.pop %v323
        %v325 = vmul.f32 %v199, 1.442695
        %v326 = vpow.pop %v325
        %v327 = vmul.f32 %v200, 1.442695
        %v328 = vpow.pop %v327
        %v329 = vsub.f32 %v202, 1.0
        %v330 = vsub.f32 %v204, 1.0
        %v331 = vsub.f32 %v206, 1.0
        %v332 = vsub.f32 %v208, 1.0
        %v333 = vsub.f32 %v210, 1.0
        %v334 = vsub.f32 %v212, 1.0
        %v335 = vsub.f32 %v214, 1.0
        %v336 = vsub.f32 %v216, 1.0
        %v337 = vsub.f32 %v218, 1.0
        %v338 = vsub.f32 %v220, 1.0
        %v339 = vsub.f32 %v222, 1.0
        %v340 = vsub.f32 %v224, 1.0
        %v341 = vsub.f32 %v226, 1.0
        %v342 = vsub.f32 %v228, 1.0
        %v343 = vsub.f32 %v230, 1.0
        %v344 = vsub.f32 %v232, 1.0
        %v345 = vsub.f32 %v234, 1.0
        %v346 = vsub.f32 %v236, 1.0
        %v347 = vsub.f32 %v238, 1.0
        %v348 = vsub.f32 %v240, 1.0
        %v349 = vsub.f32 %v242, 1.0
        %v350 = vsub.f32 %v244, 1.0
        %v351 = vsub.f32 %v246, 1.0
        %v352 = vsub.f32 %v248, 1.0
        %v353 = vsub.f32 %v250, 1.0
        %v354 = vsub.f32 %v252, 1.0
        %v355 = vsub.f32 %v254, 1.0
        %v356 = vsub.f32 %v256, 1.0
        %v357 = vsub.f32 %v258, 1.0
        %v358 = vsub.f32 %v260, 1.0
        %v359 = vsub.f32 %v262, 1.0
        %v360 = vsub.f32 %v264, 1.0
        %v361 = vsub.f32 %v266, 1.0
        %v362 = vsub.f32 %v268, 1.0
        %v363 = vsub.f32 %v270, 1.0
        %v364 = vsub.f32 %v272, 1.0
        %v365 = vsub.f32 %v274, 1.0
        %v366 = vsub.f32 %v276, 1.0
        %v367 = vsub.f32 %v278, 1.0
        %v368 = vsub.f32 %v280, 1.0
        %v369 = vsub.f32 %v282, 1.0
        %v370 = vsub.f32 %v284, 1.0
        %v371 = vsub.f32 %v286, 1.0
        %v372 = vsub.f32 %v288, 1.0
        %v373 = vsub.f32 %v290, 1.0
        %v374 = vsub.f32 %v292, 1.0
        %v375 = vsub.f32 %v294, 1.0
        %v376 = vsub.f32 %v296, 1.0
        %v377 = vsub.f32 %v298, 1.0
        %v378 = vsub.f32 %v300, 1.0
        %v379 = vsub.f32 %v302, 1.0
        %v380 = vsub.f32 %v304, 1.0
        %v381 = vsub.f32 %v306, 1.0
        %v382 = vsub.f32 %v308, 1.0
        %v383 = vsub.f32 %v310, 1.0
        %v384 = vsub.f32 %v312, 1.0
        %v385 = vsub.f32 %v314, 1.0
        %v386 = vsub.f32 %v316, 1.0
        %v387 = vsub.f32 %v318, 1.0
        %v388 = vsub.f32 %v320, 1.0
        %v389 = vsub.f32 %v322, 1.0
        %v390 = vsub.f32 %v324, 1.0
        %v391 = vsub.f32 %v326, 1.0
        %v392 = vsub.f32 %v328, 1.0
        %v393 = vmax.f32 %v329, 1e-05
        %v394 = vmax.f32 %v330, 1e-05
        %v395 = vmax.f32 %v331, 1e-05
        %v396 = vmax.f32 %v332, 1e-05
        %v397 = vmax.f32 %v333, 1e-05
        %v398 = vmax.f32 %v334, 1e-05
        %v399 = vmax.f32 %v335, 1e-05
        %v400 = vmax.f32 %v336, 1e-05
        %v401 = vmax.f32 %v337, 1e-05
        %v402 = vmax.f32 %v338, 1e-05
        %v403 = vmax.f32 %v339, 1e-05
        %v404 = vmax.f32 %v340, 1e-05
        %v405 = vmax.f32 %v341, 1e-05
        %v406 = vmax.f32 %v342, 1e-05
        %v407 = vmax.f32 %v343, 1e-05
        %v408 = vmax.f32 %v344, 1e-05
        %v409 = vmax.f32 %v345, 1e-05
        %v410 = vmax.f32 %v346, 1e-05
        %v411 = vmax.f32 %v347, 1e-05
        %v412 = vmax.f32 %v348, 1e-05
        %v413 = vmax.f32 %v349, 1e-05
        %v414 = vmax.f32 %v350, 1e-05
        %v415 = vmax.f32 %v351, 1e-05
        %v416 = vmax.f32 %v352, 1e-05
        %v417 = vmax.f32 %v353, 1e-05
        %v418 = vmax.f32 %v354, 1e-05
        %v419 = vmax.f32 %v355, 1e-05
        %v420 = vmax.f32 %v356, 1e-05
        %v421 = vmax.f32 %v357, 1e-05
        %v422 = vmax.f32 %v358, 1e-05
        %v423 = vmax.f32 %v359, 1e-05
        %v424 = vmax.f32 %v360, 1e-05
        %v425 = vmax.f32 %v361, 1e-05
        %v426 = vmax.f32 %v362, 1e-05
        %v427 = vmax.f32 %v363, 1e-05
        %v428 = vmax.f32 %v364, 1e-05
        %v429 = vmax.f32 %v365, 1e-05
        %v430 = vmax.f32 %v366, 1e-05
        %v431 = vmax.f32 %v367, 1e-05
        %v432 = vmax.f32 %v368, 1e-05
        %v433 = vmax.f32 %v369, 1e-05
        %v434 = vmax.f32 %v370, 1e-05
        %v435 = vmax.f32 %v371, 1e-05
        %v436 = vmax.f32 %v372, 1e-05
        %v437 = vmax.f32 %v373, 1e-05
        %v438 = vmax.f32 %v374, 1e-05
        %v439 = vmax.f32 %v375, 1e-05
        %v440 = vmax.f32 %v376, 1e-05
        %v441 = vmax.f32 %v377, 1e-05
        %v442 = vmax.f32 %v378, 1e-05
        %v443 = vmax.f32 %v379, 1e-05
        %v444 = vmax.f32 %v380, 1e-05
        %v445 = vmax.f32 %v381, 1e-05
        %v446 = vmax.f32 %v382, 1e-05
        %v447 = vmax.f32 %v383, 1e-05
        %v448 = vmax.f32 %v384, 1e-05
        %v449 = vmax.f32 %v385, 1e-05
        %v450 = vmax.f32 %v386, 1e-05
        %v451 = vmax.f32 %v387, 1e-05
        %v452 = vmax.f32 %v388, 1e-05
        %v453 = vmax.f32 %v389, 1e-05
        %v454 = vmax.f32 %v390, 1e-05
        %v455 = vmax.f32 %v391, 1e-05
        %v456 = vmax.f32 %v392, 1e-05
        %v457 = vmin.f32 %v393, 1000000.0
        %v458 = vmin.f32 %v394, 1000000.0
        %v459 = vmin.f32 %v395, 1000000.0
        %v460 = vmin.f32 %v396, 1000000.0
        %v461 = vmin.f32 %v397, 1000000.0
        %v462 = vmin.f32 %v398, 1000000.0
        %v463 = vmin.f32 %v399, 1000000.0
        %v464 = vmin.f32 %v400, 1000000.0
        %v465 = vmin.f32 %v401, 1000000.0
        %v466 = vmin.f32 %v402, 1000000.0
        %v467 = vmin.f32 %v403, 1000000.0
        %v468 = vmin.f32 %v404, 1000000.0
        %v469 = vmin.f32 %v405, 1000000.0
        %v470 = vmin.f32 %v406, 1000000.0
        %v471 = vmin.f32 %v407, 1000000.0
        %v472 = vmin.f32 %v408, 1000000.0
        %v473 = vmin.f32 %v409, 1000000.0
        %v474 = vmin.f32 %v410, 1000000.0
        %v475 = vmin.f32 %v411, 1000000.0
        %v476 = vmin.f32 %v412, 1000000.0
        %v477 = vmin.f32 %v413, 1000000.0
        %v478 = vmin.f32 %v414, 1000000.0
        %v479 = vmin.f32 %v415, 1000000.0
        %v480 = vmin.f32 %v416, 1000000.0
        %v481 = vmin.f32 %v417, 1000000.0
        %v482 = vmin.f32 %v418, 1000000.0
        %v483 = vmin.f32 %v419, 1000000.0
        %v484 = vmin.f32 %v420, 1000000.0
        %v485 = vmin.f32 %v421, 1000000.0
        %v486 = vmin.f32 %v422, 1000000.0
        %v487 = vmin.f32 %v423, 1000000.0
        %v488 = vmin.f32 %v424, 1000000.0
        %v489 = vmin.f32 %v425, 1000000.0
        %v490 = vmin.f32 %v426, 1000000.0
        %v491 = vmin.f32 %v427, 1000000.0
        %v492 = vmin.f32 %v428, 1000000.0
        %v493 = vmin.f32 %v429, 1000000.0
        %v494 = vmin.f32 %v430, 1000000.0
        %v495 = vmin.f32 %v431, 1000000.0
        %v496 = vmin.f32 %v432, 1000000.0
        %v497 = vmin.f32 %v433, 1000000.0
        %v498 = vmin.f32 %v434, 1000000.0
        %v499 = vmin.f32 %v435, 1000000.0
        %v500 = vmin.f32 %v436, 1000000.0
        %v501 = vmin.f32 %v437, 1000000.0
        %v502 = vmin.f32 %v438, 1000000.0
        %v503 = vmin.f32 %v439, 1000000.0
        %v504 = vmin.f32 %v440, 1000000.0
        %v505 = vmin.f32 %v441, 1000000.0
        %v506 = vmin.f32 %v442, 1000000.0
        %v507 = vmin.f32 %v443, 1000000.0
        %v508 = vmin.f32 %v444, 1000000.0
        %v509 = vmin.f32 %v445, 1000000.0
        %v510 = vmin.f32 %v446, 1000000.0
        %v511 = vmin.f32 %v447, 1000000.0
        %v512 = vmin.f32 %v448, 1000000.0
        %v513 = vmin.f32 %v449, 1000000.0
        %v514 = vmin.f32 %v450, 1000000.0
        %v515 = vmin.f32 %v451, 1000000.0
        %v516 = vmin.f32 %v452, 1000000.0
        %v517 = vmin.f32 %v453, 1000000.0
        %v518 = vmin.f32 %v454, 1000000.0
        %v519 = vmin.f32 %v455, 1000000.0
        %v520 = vmin.f32 %v456, 1000000.0
        %521 = vst [vmem:[%s134] sm:$0xff] %v457
        %522 = vst [vmem:[%s134 + $0x8] sm:$0xff] %v458
        %523 = vst [vmem:[%s134 + $0x10] sm:$0xff] %v459
        %524 = vst [vmem:[%s134 + $0x18] sm:$0xff] %v460
        %525 = vst [vmem:[%s134 + $0x20] sm:$0xff] %v461
        %526 = vst [vmem:[%s134 + $0x28] sm:$0xff] %v462
        %527 = vst [vmem:[%s134 + $0x30] sm:$0xff] %v463
        %528 = vst [vmem:[%s134 + $0x38] sm:$0xff] %v464
        %529 = vst [vmem:[%s134 + $0x40] sm:$0xff] %v465
        %530 = vst [vmem:[%s134 + $0x48] sm:$0xff] %v466
        %531 = vst [vmem:[%s134 + $0x50] sm:$0xff] %v467
        %532 = vst [vmem:[%s134 + $0x58] sm:$0xff] %v468
        %533 = vst [vmem:[%s134 + $0x60] sm:$0xff] %v469
        %534 = vst [vmem:[%s134 + $0x68] sm:$0xff] %v470
        %535 = vst [vmem:[%s134 + $0x70] sm:$0xff] %v471
        %536 = vst [vmem:[%s134 + $0x78] sm:$0xff] %v472
        %537 = vst [vmem:[%s134 + $0x80] sm:$0xff] %v473
        %538 = vst [vmem:[%s134 + $0x88] sm:$0xff] %v474
        %539 = vst [vmem:[%s134 + $0x90] sm:$0xff] %v475
        %540 = vst [vmem:[%s134 + $0x98] sm:$0xff] %v476
        %541 = vst [vmem:[%s134 + $0xa0] sm:$0xff] %v477
        %542 = vst [vmem:[%s134 + $0xa8] sm:$0xff] %v478
        %543 = vst [vmem:[%s134 + $0xb0] sm:$0xff] %v479
        %544 = vst [vmem:[%s134 + $0xb8] sm:$0xff] %v480
        %545 = vst [vmem:[%s134 + $0xc0] sm:$0xff] %v481
        %546 = vst [vmem:[%s134 + $0xc8] sm:$0xff] %v482
        %547 = vst [vmem:[%s134 + $0xd0] sm:$0xff] %v483
        %548 = vst [vmem:[%s134 + $0xd8] sm:$0xff] %v484
        %549 = vst [vmem:[%s134 + $0xe0] sm:$0xff] %v485
        %550 = vst [vmem:[%s134 + $0xe8] sm:$0xff] %v486
        %551 = vst [vmem:[%s134 + $0xf0] sm:$0xff] %v487
        %552 = vst [vmem:[%s134 + $0xf8] sm:$0xff] %v488
        %553 = vst [vmem:[%s134 + $0x100] sm:$0xff] %v489
        %554 = vst [vmem:[%s134 + $0x108] sm:$0xff] %v490
        %555 = vst [vmem:[%s134 + $0x110] sm:$0xff] %v491
        %556 = vst [vmem:[%s134 + $0x118] sm:$0xff] %v492
        %557 = vst [vmem:[%s134 + $0x120] sm:$0xff] %v493
        %558 = vst [vmem:[%s134 + $0x128] sm:$0xff] %v494
        %559 = vst [vmem:[%s134 + $0x130] sm:$0xff] %v495
        %560 = vst [vmem:[%s134 + $0x138] sm:$0xff] %v496
        %561 = vst [vmem:[%s134 + $0x140] sm:$0xff] %v497
        %562 = vst [vmem:[%s134 + $0x148] sm:$0xff] %v498
        %563 = vst [vmem:[%s134 + $0x150] sm:$0xff] %v499
        %564 = vst [vmem:[%s134 + $0x158] sm:$0xff] %v500
        %565 = vst [vmem:[%s134 + $0x160] sm:$0xff] %v501
        %566 = vst [vmem:[%s134 + $0x168] sm:$0xff] %v502
        %567 = vst [vmem:[%s134 + $0x170] sm:$0xff] %v503
        %568 = vst [vmem:[%s134 + $0x178] sm:$0xff] %v504
        %569 = vst [vmem:[%s134 + $0x180] sm:$0xff] %v505
        %570 = vst [vmem:[%s134 + $0x188] sm:$0xff] %v506
        %571 = vst [vmem:[%s134 + $0x190] sm:$0xff] %v507
        %572 = vst [vmem:[%s134 + $0x198] sm:$0xff] %v508
        %573 = vst [vmem:[%s134 + $0x1a0] sm:$0xff] %v509
        %574 = vst [vmem:[%s134 + $0x1a8] sm:$0xff] %v510
        %575 = vst [vmem:[%s134 + $0x1b0] sm:$0xff] %v511
        %576 = vst [vmem:[%s134 + $0x1b8] sm:$0xff] %v512
        %577 = vst [vmem:[%s134 + $0x1c0] sm:$0xff] %v513
        %578 = vst [vmem:[%s134 + $0x1c8] sm:$0xff] %v514
        %579 = vst [vmem:[%s134 + $0x1d0] sm:$0xff] %v515
        %580 = vst [vmem:[%s134 + $0x1d8] sm:$0xff] %v516
        %581 = vst [vmem:[%s134 + $0x1e0] sm:$0xff] %v517
        %582 = vst [vmem:[%s134 + $0x1e8] sm:$0xff] %v518
        %583 = vst [vmem:[%s134 + $0x1f0] sm:$0xff] %v519
        %584 = vst [vmem:[%s134 + $0x1f8] sm:$0xff] %v520
        %s585 = sand.u32 %s52, 1
        %s586 = scalar_lea.sflag [#allocation4], %s585
        %s587 = sand.u32 %s52, 1
        %s588 = smul.addr %s587, 512
        %s589 = scalar_lea.vmem [#allocation5], %s588
        // Predicated region
        $region29: #{tpu_custom_call.1} parent=23 // pred_check
          %p590 = pneg %p62
        $region30: #{tpu_custom_call.1} parent=23 // pred_check_branch
          %592 = sbr.rel (%p590) target = $region32
        $region31: #{tpu_custom_call.1} parent=23 // pred_region
          %s593 = smul.u32 64, %s18
          %s595 = ssub.s32 8192, 8192
          %596 = vsyncadd %s586, %s595
          %s597 = smul.addr %s593, 128
          %s598 = scalar_lea.hbm %s1, %s597
          %s599 = sshll.u32 %s589, 4
          %s600 = int_to_ptr.vmem [resolvable:$true] %s599
          %605 = dma.vmem_to_hbm [thread:$0]  %s600, 8192, %s598, %s586, 128, 128, 8
        $region32: #{tpu_custom_call.1} parent=23 // pred_fallthru
          _
      $region24: #{tpu_custom_call.1} parent=5 // pred_fallthru
        _
      %p606 = scmp.le.s32.totalorder 2, %s13
      // Predicated region
      $region33: #{tpu_custom_call.1} parent=5 // pred_check
        %p607 = pneg %p606
      $region34: #{tpu_custom_call.1} parent=5 // pred_check_branch
        %609 = sbr.rel (%p607) target = $region36
      $region35: #{tpu_custom_call.1} parent=5 // pred_region
        %s610 = ssub.s32 %s13, 2
        // Predicated region
        $region37: #{tpu_custom_call.1} parent=35 // pred_check
          %p611 = pneg %p68
        $region38: #{tpu_custom_call.1} parent=35 // pred_check_branch
          %613 = sbr.rel (%p611) target = $region40
        $region39: #{tpu_custom_call.1} parent=35 // pred_region
          %s614 = sand.u32 %s53, 1
          %s615 = scalar_lea.sflag [#allocation4], %s614
          %s616 = sand.u32 %s53, 1
          %s617 = smul.addr %s616, 512
          %s618 = scalar_lea.vmem [#allocation5], %s617
          %619 = dma.done %s615, 8192
        $region40: #{tpu_custom_call.1} parent=35 // pred_fallthru
          _
      $region36: #{tpu_custom_call.1} parent=5 // pred_fallthru
        _
    $region6: #{tpu_custom_call.1} parent=1 // loop_footer
      %s17 = sadd.s32 1, %s13
    $region7: #{tpu_custom_call.1} parent=1 // loop_footer_branch
      %12 = sbr.rel target = $region3
    $region8: #{tpu_custom_call.1} parent=1 // loop_exit
      _
    %620 = vsyncpa [#allocation3], 1
    %s621 = scalar_lea.sflag [#allocation3], 1
    %622 = vsyncpa %s621, 1
    %623 = vsyncpa [#allocation4], 1
    %s624 = scalar_lea.sflag [#allocation4], 1
    %625 = vsyncpa %s624, 1

</llo_original>
